<compile_context>
chip_gen: v6e
topology: v6e:2x2x1
jax: 0.10.0
libtpu: 0.0.40
codegen_flags: <defaults>
</compile_context>

<pallas_src>
import functools
import math

import jax
import jax.numpy as jnp
from jax.experimental import pallas as pl
from jax.experimental.pallas import tpu as pltpu


def _tsm_kernel(x_ref, o_ref, *, T, n_fwd_blocks, bwd_start_block):
    """One grid step = one (B_BLK, C_BLK, T, HW) tile.

    Channel blocks are fold-aligned, so every tile is *entirely* one of
    {forward-shift, backward-shift, pass-through}; exactly one branch runs per
    grid step.  The shifted branches use direct sliced stores (no concat, no
    intermediate tile): 1x vector load + 1x vector store per element.
    """
    cb = pl.program_id(1)
    is_fwd = cb < n_fwd_blocks
    is_bwd = cb >= bwd_start_block

    zero_plane_shape = o_ref.shape[:2] + (1,) + o_ref.shape[3:]

    @pl.when(is_fwd)
    def _():
        if T > 1:
            # out[..., t, :] = x[..., t-1, :]; out[..., 0, :] = 0
            o_ref[:, :, pl.ds(1, T - 1), :] = x_ref[:, :, pl.ds(0, T - 1), :]
            o_ref[:, :, pl.ds(0, 1), :] = jnp.zeros(zero_plane_shape, o_ref.dtype)
        else:
            o_ref[...] = jnp.zeros(o_ref.shape, o_ref.dtype)

    @pl.when(is_bwd)
    def _():
        if T > 1:
            # out[..., t, :] = x[..., t+1, :]; out[..., T-1, :] = 0
            o_ref[:, :, pl.ds(0, T - 1), :] = x_ref[:, :, pl.ds(1, T - 1), :]
            o_ref[:, :, pl.ds(T - 1, 1), :] = jnp.zeros(zero_plane_shape, o_ref.dtype)
        else:
            o_ref[...] = jnp.zeros(o_ref.shape, o_ref.dtype)

    @pl.when(jnp.logical_and(jnp.logical_not(is_fwd), jnp.logical_not(is_bwd)))
    def _():
        o_ref[...] = x_ref[...]                                # pass-through copy


def _pick_blocks(B, C, fold, T, HW, itemsize, target_bytes):
    """Pick (batch_block, channel_block) sizes.

    Channel block must divide gcd(fold, C) so every block is entirely inside
    one of the three channel regions (fwd / middle / bwd).  If that constraint
    caps the channel block (small fold) while the tile is still far under
    `target_bytes`, grow the batch block instead so per-grid-step overhead
    (~0.35 us) stays amortized.
    """
    g = math.gcd(fold, C)
    plane = T * HW * itemsize
    c_blk = 1
    for d in range(1, g + 1):
        if g % d == 0 and d * plane <= target_bytes:
            c_blk = d
    b_blk = 1
    for d in range(1, B + 1):
        if B % d == 0 and d * c_blk * plane <= target_bytes:
            b_blk = d
    return b_blk, c_blk


def tsm_forward(x, channels_division=4, *, in_place=False,
                target_block_bytes=4 * 1024 * 1024):
    """Pallas implementation of Tsm.forward. x: (B, C, T, H, W) -> (out, None).

    in_place=True aliases the output onto the input buffer and only launches
    the kernel over the 2*fold shifted channel groups; the (C - 2*fold)
    pass-through channels are never read or written by the kernel.  Use it
    under jit with the input donated (donate_argnums) so XLA does not insert a
    defensive copy; it is correct either way.
    """
    B, C, T, H, W = x.shape
    if channels_division < 2 or C < channels_division:
        # Degenerate configs (fold == 0 or fold == C) follow different
        # slice-overwrite semantics in the PyTorch reference; reject them.
        raise ValueError(
            "tsm_forward requires channels_division >= 2 and C >= channels_division "
            "(so that 1 <= fold <= C // 2).")

    fold = C // channels_division
    HW = H * W
    itemsize = jnp.dtype(x.dtype).itemsize

    b_blk, c_blk = _pick_blocks(B, C, fold, T, HW, itemsize, target_block_bytes)
    n_b_blocks = B // b_blk
    n_blocks = C // c_blk
    n_fold_blocks = fold // c_blk
    n_mid_blocks = n_blocks - 2 * n_fold_blocks

    x4 = x.reshape(B, C, T, HW)   # lane axis = H*W (lane-dense when HW % 128 == 0)

    if in_place:
        # Only visit the first `fold` and last `fold` channels; the middle
        # channels stay untouched in the aliased output buffer.
        grid = (n_b_blocks, 2 * n_fold_blocks)
        bwd_start_block = n_fold_blocks

        def idx_map(b, cb):
            return (b, jnp.where(cb < n_fold_blocks, cb, cb + n_mid_blocks), 0, 0)

        io_aliases = {0: 0}
        bytes_accessed = 2 * B * (2 * fold) * T * HW * itemsize
    else:
        grid = (n_b_blocks, n_blocks)
        bwd_start_block = n_blocks - n_fold_blocks

        def idx_map(b, cb):
            return (b, cb, 0, 0)

        io_aliases = {}
        bytes_accessed = 2 * B * C * T * HW * itemsize

    # Right-size the scoped VMEM limit: double-buffered input + output tiles
    # plus slack for Mosaic internal scratch.  (Do NOT request 64 MiB -- that
    # is the whole per-core VMEM on v7x.)
    tile_bytes = b_blk * c_blk * T * HW * itemsize
    vmem_limit_bytes = 4 * tile_bytes + (2 << 20)
    vmem_limit_bytes = int(min(max(vmem_limit_bytes, 8 << 20), 112 << 20))

    kernel = functools.partial(
        _tsm_kernel, T=T, n_fwd_blocks=n_fold_blocks,
        bwd_start_block=bwd_start_block)

    out4 = pl.pallas_call(
        kernel,
        out_shape=jax.ShapeDtypeStruct((B, C, T, HW), x.dtype),
        grid_spec=pltpu.PrefetchScalarGridSpec(
            num_scalar_prefetch=0,
            grid=grid,
            in_specs=[pl.BlockSpec((b_blk, c_blk, T, HW), idx_map)],
            out_specs=pl.BlockSpec((b_blk, c_blk, T, HW), idx_map),
        ),
        compiler_params=pltpu.CompilerParams(
            # Every (batch-block, channel-block) tile is independent -> both
            # axes parallel (lets v7x's 2 TensorCores share the grid).
            dimension_semantics=("parallel", "parallel"),
            vmem_limit_bytes=vmem_limit_bytes,
        ),
        cost_estimate=pl.CostEstimate(
            flops=0, transcendentals=0, bytes_accessed=int(bytes_accessed)),
        input_output_aliases=io_aliases,
    )(x4)

    return out4.reshape(B, C, T, H, W), None


def _tsm_reference(x, channels_division=4):
    """Pure-JAX reference mirroring the PyTorch Tsm.shift."""
    _, c, _, _, _ = x.shape
    fold = c // channels_division
    out = jnp.zeros_like(x)
    out = out.at[:, :fold, 1:].set(x[:, :fold, :-1])
    out = out.at[:, -fold:, :-1].set(x[:, -fold:, 1:])
    out = out.at[:, fold:-fold].set(x[:, fold:-fold])
    return out


# TODO(synk): the transposed conv / concat / convs / instance-norms / leaky-relus
# of GateUnetUpBlock have no clean hand-written Pallas win over XLA and are left
# to the library; only the Tsm gate is implemented here.


if __name__ == "__main__":
    key = jax.random.PRNGKey(0)

    # in_place path, jitted with donation so the aliasing actually avoids a copy.
    tsm_inplace = jax.jit(
        functools.partial(tsm_forward, channels_division=4, in_place=True),
        donate_argnums=(0,))

    configs = [
        (2, 16, 8, 16, 16),   # fold=4: multi-channel blocks, batch blocking kicks in
        (2, 4, 8, 16, 16),    # fold=1: channel block capped at 1, batch block = 2
    ]
    for shape in configs:
        key, sub = jax.random.split(key)
        x = jax.random.normal(sub, shape, dtype=jnp.float32)
        ref = jax.block_until_ready(_tsm_reference(x, channels_division=4))

        out, aux = tsm_forward(x, channels_division=4)
        out = jax.block_until_ready(out)
        assert aux is None
        assert out.shape == x.shape and out.dtype == x.dtype
        assert jnp.array_equal(out, ref), f"mismatch vs reference (standard) {shape}"

        x_donate = jnp.array(x)                     # fresh buffer to donate
        out_ip, aux_ip = tsm_inplace(x_donate)
        out_ip = jax.block_until_ready(out_ip)
        assert aux_ip is None
        assert out_ip.shape == x.shape and out_ip.dtype == x.dtype
        assert jnp.array_equal(out_ip, ref), f"mismatch vs reference (in-place) {shape}"

    print("KERNEL_OK")
</pallas_src>

<mosaic_0001>
module attributes {stable_mosaic.version = 11 : i64} {
  func.func @_tsm_kernel(%arg0: i32, %arg1: i32, %arg2: memref<2x4x8x256xf32, #tpu.memory_space<vmem>>, %arg3: memref<2x4x8x256xf32, #tpu.memory_space<vmem>>) attributes {dimension_semantics = [#tpu.dimension_semantics<parallel>, #tpu.dimension_semantics<parallel>], iteration_bounds = array<i64: 1, 4>, scalar_prefetch = 0 : i64, scratch_operands = 0 : i64, tpu.core_type = #tpu.core_type<tc>, window_params = [{transform_indices = @transform_0, window_bounds = array<i64: 2, 4, 8, 256>}, {transform_indices = @transform_1, window_bounds = array<i64: 2, 4, 8, 256>}]} {
    %c1_i32 = arith.constant 1 : i32
    %0 = arith.cmpi slt, %arg1, %c1_i32 : i32
    %c3_i32 = arith.constant 3 : i32
    %1 = arith.cmpi sge, %arg1, %c3_i32 : i32
    %2 = arith.extui %0 : i1 to i32
    %c0_i32 = arith.constant 0 : i32
    %3 = arith.cmpi ne, %2, %c0_i32 : i32
    scf.if %3 {
      %c0 = arith.constant 0 : index
      %c0_3 = arith.constant 0 : index
      %c0_4 = arith.constant 0 : index
      %c0_5 = arith.constant 0 : index
      %11 = vector.load %arg2[%c0, %c0_3, %c0_4, %c0_5] : memref<2x4x8x256xf32, #tpu.memory_space<vmem>>, vector<2x4x7x256xf32>
      %c0_6 = arith.constant 0 : index
      %c0_7 = arith.constant 0 : index
      %c1 = arith.constant 1 : index
      %c0_8 = arith.constant 0 : index
      %12 = vector.load %arg3[%c0_6, %c0_7, %c1, %c0_8] : memref<2x4x8x256xf32, #tpu.memory_space<vmem>>, vector<2x4x7x256xf32>
      tpu.vector_store %arg3[%c0_6, %c0_7, %c1, %c0_8], %11 {strides = array<i32>} : memref<2x4x8x256xf32, #tpu.memory_space<vmem>>, vector<2x4x7x256xf32>,
      %cst = arith.constant 0.000000e+00 : f32
      %13 = vector.broadcast %cst : f32 to vector<2x4x1x256xf32>
      %c0_9 = arith.constant 0 : index
      %c0_10 = arith.constant 0 : index
      %c0_11 = arith.constant 0 : index
      %c0_12 = arith.constant 0 : index
      %14 = vector.load %arg3[%c0_9, %c0_10, %c0_11, %c0_12] : memref<2x4x8x256xf32, #tpu.memory_space<vmem>>, vector<2x4x1x256xf32>
      tpu.vector_store %arg3[%c0_9, %c0_10, %c0_11, %c0_12], %13 {strides = array<i32>} : memref<2x4x8x256xf32, #tpu.memory_space<vmem>>, vector<2x4x1x256xf32>,
    } else {
    }
    %4 = arith.extui %1 : i1 to i32
    %c0_i32_0 = arith.constant 0 : i32
    %5 = arith.cmpi ne, %4, %c0_i32_0 : i32
    scf.if %5 {
      %c0 = arith.constant 0 : index
      %c0_3 = arith.constant 0 : index
      %c1 = arith.constant 1 : index
      %c0_4 = arith.constant 0 : index
      %11 = vector.load %arg2[%c0, %c0_3, %c1, %c0_4] : memref<2x4x8x256xf32, #tpu.memory_space<vmem>>, vector<2x4x7x256xf32>
      %c0_5 = arith.constant 0 : index
      %c0_6 = arith.constant 0 : index
      %c0_7 = arith.constant 0 : index
      %c0_8 = arith.constant 0 : index
      %12 = vector.load %arg3[%c0_5, %c0_6, %c0_7, %c0_8] : memref<2x4x8x256xf32, #tpu.memory_space<vmem>>, vector<2x4x7x256xf32>
      tpu.vector_store %arg3[%c0_5, %c0_6, %c0_7, %c0_8], %11 {strides = array<i32>} : memref<2x4x8x256xf32, #tpu.memory_space<vmem>>, vector<2x4x7x256xf32>,
      %cst = arith.constant 0.000000e+00 : f32
      %13 = vector.broadcast %cst : f32 to vector<2x4x1x256xf32>
      %c0_9 = arith.constant 0 : index
      %c0_10 = arith.constant 0 : index
      %c7 = arith.constant 7 : index
      %c0_11 = arith.constant 0 : index
      %14 = vector.load %arg3[%c0_9, %c0_10, %c7, %c0_11] : memref<2x4x8x256xf32, #tpu.memory_space<vmem>>, vector<2x4x1x256xf32>
      tpu.vector_store %arg3[%c0_9, %c0_10, %c7, %c0_11], %13 {strides = array<i32>} : memref<2x4x8x256xf32, #tpu.memory_space<vmem>>, vector<2x4x1x256xf32>,
    } else {
    }
    %true = arith.constant true
    %6 = arith.xori %0, %true : i1
    %true_1 = arith.constant true
    %7 = arith.xori %1, %true_1 : i1
    %8 = arith.andi %6, %7 : i1
    %9 = arith.extui %8 : i1 to i32
    %c0_i32_2 = arith.constant 0 : i32
    %10 = arith.cmpi ne, %9, %c0_i32_2 : i32
    scf.if %10 {
      %c0 = arith.constant 0 : index
      %c0_3 = arith.constant 0 : index
      %c0_4 = arith.constant 0 : index
      %c0_5 = arith.constant 0 : index
      %11 = vector.load %arg2[%c0, %c0_3, %c0_4, %c0_5] : memref<2x4x8x256xf32, #tpu.memory_space<vmem>>, vector<2x4x8x256xf32>
      %c0_6 = arith.constant 0 : index
      %c0_7 = arith.constant 0 : index
      %c0_8 = arith.constant 0 : index
      %c0_9 = arith.constant 0 : index
      %12 = vector.load %arg3[%c0_6, %c0_7, %c0_8, %c0_9] : memref<2x4x8x256xf32, #tpu.memory_space<vmem>>, vector<2x4x8x256xf32>
      tpu.vector_store %arg3[%c0_6, %c0_7, %c0_8, %c0_9], %11 {strides = array<i32>} : memref<2x4x8x256xf32, #tpu.memory_space<vmem>>, vector<2x4x8x256xf32>,
    } else {
    }
    return
  }
  func.func @transform_0(%arg0: i32, %arg1: i32) -> (i32, i32, i32, i32) {
    %c0_i32 = arith.constant 0 : i32
    %c0_i32_0 = arith.constant 0 : i32
    %c0_i32_1 = arith.constant 0 : i32
    return %arg0, %arg1, %c0_i32, %c0_i32_0 : i32, i32, i32, i32
  }
  func.func @transform_1(%arg0: i32, %arg1: i32) -> (i32, i32, i32, i32) {
    %c0_i32 = arith.constant 0 : i32
    %c0_i32_0 = arith.constant 0 : i32
    %c0_i32_1 = arith.constant 0 : i32
    return %arg0, %arg1, %c0_i32, %c0_i32_0 : i32, i32, i32, i32
  }
}

</mosaic_0001>

<llo_original>
// kernel: tpu_custom_call.1
$region0: #{tpu_custom_call.1}
  #allocation0 [shape = 'u32[]', space=smem, size = 0x4, offset = 0x4, fixed_abs, tag = 'smem constant byte address 0x4 - core index']
  #allocation1 [shape = 'u32[144,128]{1,0:T(1,128)}', space=vmem, size = 0x12000, scoped, tag = 'internal scratch']
  #allocation6 [shape = 's32[]', space=sflag, size = 0x4, offset = 0, fixed_abs, tag = 'sflag constant byte address 0x0 - dummy sync flag']
  #allocation8 [shape = 's32[]', space=sflag, size = 0x4, offset = 0, fixed_abs, tag = 'sflag constant byte address 0x0 - dummy sync flag']
  %s0 = inlined_call_operand.hbm [shape: f32[2,16,8,256], index: 0, kind: input, shape index: {}]
  %s1 = inlined_call_operand.hbm [shape: f32[2,16,8,256], index: 1, kind: output, shape index: {}]
  %s2 = sld [smem:[#allocation0]]
  $region53: #{tpu_custom_call.1} parent=0
    _
  %s4 = ssub.s32 1, %s2
  %s5 = scalar_select 0, %s4, %s2
  $region1: #{tpu_custom_call.1} parent=0
    #allocation2 [shape = 'u8[131072]{0}', space=vmem, size = 0x20000, scoped, tag = 'input window, operand 0']
    #allocation3 [shape = 's32[2]{0}', space=sflag, size = 0x8, scoped, tag = 'scoped memory for tpu_custom_call.1']
    #allocation4 [shape = 's32[2]{0}', space=sflag, size = 0x8, scoped, tag = 'scoped memory for tpu_custom_call.1']
    #allocation5 [shape = 'u8[131072]{0}', space=vmem, size = 0x20000, scoped, tag = 'output window, operand 0']
    %6 = vsyncpa [#allocation3], 0
    %s7 = scalar_lea.sflag [#allocation3], 1
    %8 = vsyncpa %s7, 0
    %9 = vsyncpa [#allocation4], 0
    %s10 = scalar_lea.sflag [#allocation4], 1
    %11 = vsyncpa %s10, 0
    loop: start=0, step=1, limit=6
    $region2: #{tpu_custom_call.1} parent=1 // loop_pre_header
      _
    $region3: #{tpu_custom_call.1} parent=1 // loop_header
      %s13 = sphi 0, %s17
      %p14 = scmp.ge.s32.totalorder %s13, 6
      %s20 = sphi 0, %s32
      %s21 = sphi 0, %s28
      %s22 = sphi 0, %s20
      %s23 = sphi 0, %s21
      %s24 = sphi 0, %s22
      %s25 = sphi 0, %s23
      %s37 = sphi 0, %s39
      %s40 = sphi 0, %s37
      %s41 = sphi 0, %s40
      %s57 = sphi 0, %s41
      %s65 = sphi 0, %s67
      %s68 = sphi 0, %s65
      %s69 = sphi 0, %s68
      %s85 = sphi 0, %s69
    $region4: #{tpu_custom_call.1} parent=1 // loop_header_branch
      %16 = sbr.rel (%p14) target = $region8
    $region5: #{tpu_custom_call.1} parent=1 // loop_body
      %s18 = ssub.s32 %s13, 1
      %s19 = ssub.s32 %s13, 2
      %s26 = sadd.s32 1, %s21
      %p27 = scmp.ge.s32.totalorder %s26, 4
      %s28 = scalar_select %p27, 0, %s26
      %s29 = sadd.s32 1, %s20
      %s30 = scalar_select %p27, %s29, %s20
      %p31 = scmp.ge.s32.totalorder %s30, 1
      %s32 = scalar_select %p31, 0, %s30
      %s33 = ssub.s32 %s20, %s32
      %s34 = ssub.s32 %s21, %s28
      %s35 = sor.u32 %s33, %s34
      %p36 = scmp.eq.s32.totalorder %s35, 0
      %s38 = sadd.s32 %s37, 1
      %s39 = scalar_select %p36, %s37, %s38
      %p42 = pneg %p36
      %p43 = scmp.eq.s32.totalorder %s13, 3
      %p44 = por %p42, %p43
      %p45 = scmp.ne.s32.totalorder %s37, %s40
      %p46 = scmp.eq.s32.totalorder %s13, 0
      %p47 = por %p45, %p46
      %p48 = scmp.ne.s32.totalorder %s37, %s40
      %p49 = scmp.eq.s32.totalorder %s18, 3
      %p50 = por %p48, %p49
      %p51 = scmp.ne.s32.totalorder %s40, %s41
      %p52 = scmp.eq.s32.totalorder %s18, 0
      %p53 = por %p51, %p52
      %p54 = scmp.ne.s32.totalorder %s40, %s41
      %p55 = scmp.eq.s32.totalorder %s19, 3
      %p56 = por %p54, %p55
      %p58 = scmp.ne.s32.totalorder %s41, %s57
      %p59 = scmp.eq.s32.totalorder %s19, 0
      %p60 = por %p58, %p59
      %s61 = ssub.s32 %s20, %s32
      %s62 = ssub.s32 %s21, %s28
      %s63 = sor.u32 %s61, %s62
      %p64 = scmp.eq.s32.totalorder %s63, 0
      %s66 = sadd.s32 %s65, 1
      %s67 = scalar_select %p64, %s65, %s66
      %p70 = pneg %p64
      %p71 = scmp.eq.s32.totalorder %s13, 3
      %p72 = por %p70, %p71
      %p73 = scmp.ne.s32.totalorder %s65, %s68
      %p74 = scmp.eq.s32.totalorder %s13, 0
      %p75 = por %p73, %p74
      %p76 = scmp.ne.s32.totalorder %s65, %s68
      %p77 = scmp.eq.s32.totalorder %s18, 3
      %p78 = por %p76, %p77
      %p79 = scmp.ne.s32.totalorder %s68, %s69
      %p80 = scmp.eq.s32.totalorder %s18, 0
      %p81 = por %p79, %p80
      %p82 = scmp.ne.s32.totalorder %s68, %s69
      %p83 = scmp.eq.s32.totalorder %s19, 3
      %p84 = por %p82, %p83
      %p86 = scmp.ne.s32.totalorder %s69, %s85
      %p87 = scmp.eq.s32.totalorder %s19, 0
      %p88 = por %p86, %p87
      %p89 = scmp.le.s32.totalorder 1, %s13
      %p90 = scmp.lt.s32.totalorder %s13, 5
      %p91 = pnand %p89, %p90
      %p92 = pneg %p91
      // Predicated region
      $region9: #{tpu_custom_call.1} parent=5 // pred_check
        _
      $region10: #{tpu_custom_call.1} parent=5 // pred_check_branch
        %94 = sbr.rel (%p91) target = $region12
      $region11: #{tpu_custom_call.1} parent=5 // pred_region
        %s95 = ssub.s32 %s13, 1
      $region12: #{tpu_custom_call.1} parent=5 // pred_fallthru
        _
      %p96 = scmp.lt.s32.totalorder %s13, 4
      // Predicated region
      $region13: #{tpu_custom_call.1} parent=5 // pred_check
        %p97 = pneg %p96
      $region14: #{tpu_custom_call.1} parent=5 // pred_check_branch
        %99 = sbr.rel (%p97) target = $region16
      $region15: #{tpu_custom_call.1} parent=5 // pred_region
        // Predicated region
        $region17: #{tpu_custom_call.1} parent=15 // pred_check
          %p100 = pneg %p47
        $region18: #{tpu_custom_call.1} parent=15 // pred_check_branch
          %102 = sbr.rel (%p100) target = $region20
        $region19: #{tpu_custom_call.1} parent=15 // pred_region
          #allocation7 [shape = 'u32[6]{0}', space=smem, size = 0x18, scoped, tag = 'DMA stride descriptor']
          %s103 = sand.u32 %s37, 1
          %s104 = scalar_lea.sflag [#allocation3], %s103
          %s105 = sand.u32 %s37, 1
          %s106 = smul.addr %s105, 128
          %s107 = scalar_lea.vmem [#allocation2], %s106
          %s108 = smul.u32 2, %s20
          %s109 = smul.u32 4, %s21
          %s111 = ssub.s32 2048, 2048
          %112 = vsyncadd %s104, %s111
          %s113 = smul.addr %s109, 2
          %s114 = smul.addr %s108, 32
          %s115 = sadd.s32 %s113, %s114
          %s116 = smul.addr %s115, 128
          %s117 = scalar_lea.hbm %s0, %s116
          %s119 = sshll.u32 1, 14
          %s120 = sxor.u32 4294967295, %s119
          %s122 = sld [smem:[#allocation0]]
          %s123 = sadd.s32 2, %s122
          %s125 = sshll.u32 7, 26
          %s126 = sxor.u32 4294967295, %s125
          %s127 = sand.u32 0, %s126
          %s128 = sshll.u32 %s123, 26
          %s129 = sor.u32 %s127, %s128
          %s130 = sshll.u32 %s107, 4
          %s131 = int_to_ptr.vmem [resolvable:$true] %s130
          %137 = sst [smem:[#allocation7]] 4096
          %s138 = scalar_lea.smem [#allocation7], 1
          %139 = sst [smem:[%s138]] 1024
          %s140 = scalar_lea.smem [#allocation7], 2
          %141 = sst [smem:[%s140]] 4
          %s142 = scalar_lea.smem [#allocation7], 3
          %143 = sst [smem:[%s142]] 256
          %s144 = scalar_lea.smem [#allocation7], 4
          %145 = sst [smem:[%s144]] 256
          %s146 = scalar_lea.smem [#allocation7], 5
          %147 = sst [smem:[%s146]] 16
          %149 = dma.general %s117, 2048, %s131, %s104, 131072, [#allocation7], %s129, 0
        $region20: #{tpu_custom_call.1} parent=15 // pred_fallthru
          _
      $region16: #{tpu_custom_call.1} parent=5 // pred_fallthru
        _
      %p150 = scmp.le.s32.totalorder 1, %s13
      %p151 = scmp.lt.s32.totalorder %s13, 5
      %p152 = pnand %p150, %p151
      %p153 = pneg %p152
      // Predicated region
      $region21: #{tpu_custom_call.1} parent=5 // pred_check
        _
      $region22: #{tpu_custom_call.1} parent=5 // pred_check_branch
        %155 = sbr.rel (%p152) target = $region24
      $region23: #{tpu_custom_call.1} parent=5 // pred_region
        %s156 = ssub.s32 %s13, 1
        %s157 = sand.u32 %s40, 1
        %s158 = scalar_lea.sflag [#allocation3], %s157
        %s159 = sand.u32 %s40, 1
        %s160 = smul.addr %s159, 128
        %s161 = scalar_lea.vmem [#allocation2], %s160
        // Predicated region
        $region25: #{tpu_custom_call.1} parent=23 // pred_check
          %p162 = pneg %p53
        $region26: #{tpu_custom_call.1} parent=23 // pred_check_branch
          %164 = sbr.rel (%p162) target = $region28
        $region27: #{tpu_custom_call.1} parent=23 // pred_region
          %165 = dma.done %s158, 2048
        $region28: #{tpu_custom_call.1} parent=23 // pred_fallthru
          _
        %s166 = sand.u32 %s40, 1
        %s167 = scalar_lea.sflag [#allocation3], %s166
        %s168 = sand.u32 %s40, 1
        %s169 = smul.addr %s168, 128
        %s170 = scalar_lea.vmem [#allocation2], %s169
        %p171 = pneg %p53
        %p172 = pneg %p50
        %p173 = pneg %p81
        %p174 = pneg %p78
        %s175 = sand.u32 %s68, 1
        %s176 = scalar_lea.sflag [#allocation4], %s175
        %s177 = sand.u32 %s68, 1
        %s178 = smul.addr %s177, 128
        %s179 = scalar_lea.vmem [#allocation5], %s178
        %s180 = smul.u32 2, %s22
        %s181 = smul.u32 4, %s23
        %s182 = smul.u32 2, %s22
        %s183 = smul.u32 4, %s23
        %p184 = scmp.lt.s32.totalorder %s23, 1
        %p185 = scmp.ge.s32.totalorder %s23, 3
        // Predicated region
        $region29: #{tpu_custom_call.1} parent=23 // pred_check
          %p186 = pneg %p184
        $region30: #{tpu_custom_call.1} parent=23 // pred_check_branch
          %188 = sbr.rel (%p186) target = $region32
        $region31: #{tpu_custom_call.1} parent=23 // pred_region
          %v189 = vld [vmem:[%s161] sm:$0x7f]
          %v190 = vld [vmem:[%s161 + $0x8] sm:$0x7f]
          %v191 = vld [vmem:[%s161 + $0x10] sm:$0x7f]
          %v192 = vld [vmem:[%s161 + $0x18] sm:$0x7f]
          %v193 = vld [vmem:[%s161 + $0x20] sm:$0x7f]
          %v194 = vld [vmem:[%s161 + $0x28] sm:$0x7f]
          %v195 = vld [vmem:[%s161 + $0x30] sm:$0x7f]
          %v196 = vld [vmem:[%s161 + $0x38] sm:$0x7f]
          %v197 = vld [vmem:[%s161 + $0x40] sm:$0x7f]
          %v198 = vld [vmem:[%s161 + $0x48] sm:$0x7f]
          %v199 = vld [vmem:[%s161 + $0x50] sm:$0x7f]
          %v200 = vld [vmem:[%s161 + $0x58] sm:$0x7f]
          %v201 = vld [vmem:[%s161 + $0x60] sm:$0x7f]
          %v202 = vld [vmem:[%s161 + $0x68] sm:$0x7f]
          %v203 = vld [vmem:[%s161 + $0x70] sm:$0x7f]
          %v204 = vld [vmem:[%s161 + $0x78] sm:$0x7f]
          %v221 = vrot.slane %v189, 7
          %v222 = vrot.slane %v190, 7
          %v223 = vrot.slane %v191, 7
          %v224 = vrot.slane %v192, 7
          %v225 = vrot.slane %v193, 7
          %v226 = vrot.slane %v194, 7
          %v227 = vrot.slane %v195, 7
          %v228 = vrot.slane %v196, 7
          %v229 = vrot.slane %v197, 7
          %v230 = vrot.slane %v198, 7
          %v231 = vrot.slane %v199, 7
          %v232 = vrot.slane %v200, 7
          %v233 = vrot.slane %v201, 7
          %v234 = vrot.slane %v202, 7
          %v235 = vrot.slane %v203, 7
          %v236 = vrot.slane %v204, 7
          %253 = vst [vmem:[%s179] sm:$0xfe] %v221
          %254 = vst [vmem:[%s179 + $0x8] sm:$0xfe] %v222
          %255 = vst [vmem:[%s179 + $0x10] sm:$0xfe] %v223
          %256 = vst [vmem:[%s179 + $0x18] sm:$0xfe] %v224
          %257 = vst [vmem:[%s179 + $0x20] sm:$0xfe] %v225
          %258 = vst [vmem:[%s179 + $0x28] sm:$0xfe] %v226
          %259 = vst [vmem:[%s179 + $0x30] sm:$0xfe] %v227
          %260 = vst [vmem:[%s179 + $0x38] sm:$0xfe] %v228
          %261 = vst [vmem:[%s179 + $0x40] sm:$0xfe] %v229
          %262 = vst [vmem:[%s179 + $0x48] sm:$0xfe] %v230
          %263 = vst [vmem:[%s179 + $0x50] sm:$0xfe] %v231
          %264 = vst [vmem:[%s179 + $0x58] sm:$0xfe] %v232
          %265 = vst [vmem:[%s179 + $0x60] sm:$0xfe] %v233
          %266 = vst [vmem:[%s179 + $0x68] sm:$0xfe] %v234
          %267 = vst [vmem:[%s179 + $0x70] sm:$0xfe] %v235
          %268 = vst [vmem:[%s179 + $0x78] sm:$0xfe] %v236
          %v269 = vlaneseq
          %vm270 = vcmp.ge.s32.totalorder %v269, 0
          %vm271 = vcmp.lt.s32.totalorder %v269, 256
          %vm272 = vmand %vm270, %vm271
          %273 = vst.msk [vmem:[%s179] ss:$8 sm:$0x3] %vm272, 0.0
          %274 = vst.msk [vmem:[%s179] ss:$8 sm:$0x0] %vm272, 0.0
          %s275 = scalar_lea.vmem %s179, 16 [#allocation5]
          %276 = vst.msk [vmem:[%s275] ss:$8 sm:$0x3] %vm272, 0.0
          %277 = vst.msk [vmem:[%s275] ss:$8 sm:$0x0] %vm272, 0.0
          %s278 = scalar_lea.vmem %s179, 32 [#allocation5]
          %279 = vst.msk [vmem:[%s278] ss:$8 sm:$0x3] %vm272, 0.0
          %280 = vst.msk [vmem:[%s278] ss:$8 sm:$0x0] %vm272, 0.0
          %s281 = scalar_lea.vmem %s179, 48 [#allocation5]
          %282 = vst.msk [vmem:[%s281] ss:$8 sm:$0x3] %vm272, 0.0
          %283 = vst.msk [vmem:[%s281] ss:$8 sm:$0x0] %vm272, 0.0
          %s284 = scalar_lea.vmem %s179, 64 [#allocation5]
          %285 = vst.msk [vmem:[%s284] ss:$8 sm:$0x3] %vm272, 0.0
          %286 = vst.msk [vmem:[%s284] ss:$8 sm:$0x0] %vm272, 0.0
          %s287 = scalar_lea.vmem %s179, 80 [#allocation5]
          %288 = vst.msk [vmem:[%s287] ss:$8 sm:$0x3] %vm272, 0.0
          %289 = vst.msk [vmem:[%s287] ss:$8 sm:$0x0] %vm272, 0.0
          %s290 = scalar_lea.vmem %s179, 96 [#allocation5]
          %291 = vst.msk [vmem:[%s290] ss:$8 sm:$0x3] %vm272, 0.0
          %292 = vst.msk [vmem:[%s290] ss:$8 sm:$0x0] %vm272, 0.0
          %s293 = scalar_lea.vmem %s179, 112 [#allocation5]
          %294 = vst.msk [vmem:[%s293] ss:$8 sm:$0x3] %vm272, 0.0
          %295 = vst.msk [vmem:[%s293] ss:$8 sm:$0x0] %vm272, 0.0
        $region32: #{tpu_custom_call.1} parent=23 // pred_fallthru
          _
        // Predicated region
        $region33: #{tpu_custom_call.1} parent=23 // pred_check
          %p296 = pneg %p185
        $region34: #{tpu_custom_call.1} parent=23 // pred_check_branch
          %298 = sbr.rel (%p296) target = $region36
        $region35: #{tpu_custom_call.1} parent=23 // pred_region
          %v299 = vld [vmem:[%s161] sm:$0xfe]
          %v300 = vld [vmem:[%s161 + $0x8] sm:$0xfe]
          %v301 = vld [vmem:[%s161 + $0x10] sm:$0xfe]
          %v302 = vld [vmem:[%s161 + $0x18] sm:$0xfe]
          %v303 = vld [vmem:[%s161 + $0x20] sm:$0xfe]
          %v304 = vld [vmem:[%s161 + $0x28] sm:$0xfe]
          %v305 = vld [vmem:[%s161 + $0x30] sm:$0xfe]
          %v306 = vld [vmem:[%s161 + $0x38] sm:$0xfe]
          %v307 = vld [vmem:[%s161 + $0x40] sm:$0xfe]
          %v308 = vld [vmem:[%s161 + $0x48] sm:$0xfe]
          %v309 = vld [vmem:[%s161 + $0x50] sm:$0xfe]
          %v310 = vld [vmem:[%s161 + $0x58] sm:$0xfe]
          %v311 = vld [vmem:[%s161 + $0x60] sm:$0xfe]
          %v312 = vld [vmem:[%s161 + $0x68] sm:$0xfe]
          %v313 = vld [vmem:[%s161 + $0x70] sm:$0xfe]
          %v314 = vld [vmem:[%s161 + $0x78] sm:$0xfe]
          %v331 = vrot.slane %v299, 1
          %v332 = vrot.slane %v300, 1
          %v333 = vrot.slane %v301, 1
          %v334 = vrot.slane %v302, 1
          %v335 = vrot.slane %v303, 1
          %v336 = vrot.slane %v304, 1
          %v337 = vrot.slane %v305, 1
          %v338 = vrot.slane %v306, 1
          %v339 = vrot.slane %v307, 1
          %v340 = vrot.slane %v308, 1
          %v341 = vrot.slane %v309, 1
          %v342 = vrot.slane %v310, 1
          %v343 = vrot.slane %v311, 1
          %v344 = vrot.slane %v312, 1
          %v345 = vrot.slane %v313, 1
          %v346 = vrot.slane %v314, 1
          %363 = vst [vmem:[%s179] sm:$0x7f] %v331
          %364 = vst [vmem:[%s179 + $0x8] sm:$0x7f] %v332
          %365 = vst [vmem:[%s179 + $0x10] sm:$0x7f] %v333
          %366 = vst [vmem:[%s179 + $0x18] sm:$0x7f] %v334
          %367 = vst [vmem:[%s179 + $0x20] sm:$0x7f] %v335
          %368 = vst [vmem:[%s179 + $0x28] sm:$0x7f] %v336
          %369 = vst [vmem:[%s179 + $0x30] sm:$0x7f] %v337
          %370 = vst [vmem:[%s179 + $0x38] sm:$0x7f] %v338
          %371 = vst [vmem:[%s179 + $0x40] sm:$0x7f] %v339
          %372 = vst [vmem:[%s179 + $0x48] sm:$0x7f] %v340
          %373 = vst [vmem:[%s179 + $0x50] sm:$0x7f] %v341
          %374 = vst [vmem:[%s179 + $0x58] sm:$0x7f] %v342
          %375 = vst [vmem:[%s179 + $0x60] sm:$0x7f] %v343
          %376 = vst [vmem:[%s179 + $0x68] sm:$0x7f] %v344
          %377 = vst [vmem:[%s179 + $0x70] sm:$0x7f] %v345
          %378 = vst [vmem:[%s179 + $0x78] sm:$0x7f] %v346
          %v379 = vlaneseq
          %vm380 = vcmp.ge.s32.totalorder %v379, 0
          %vm381 = vcmp.lt.s32.totalorder %v379, 256
          %vm382 = vmand %vm380, %vm381
          %s383 = scalar_lea.vmem %s179, 7 [#allocation5]
          %384 = vst.msk [vmem:[%s383] ss:$8 sm:$0x3] %vm382, 0.0
          %385 = vst.msk [vmem:[%s383] ss:$8 sm:$0x0] %vm382, 0.0
          %s386 = scalar_lea.vmem %s179, 23 [#allocation5]
          %387 = vst.msk [vmem:[%s386] ss:$8 sm:$0x3] %vm382, 0.0
          %388 = vst.msk [vmem:[%s386] ss:$8 sm:$0x0] %vm382, 0.0
          %s389 = scalar_lea.vmem %s179, 39 [#allocation5]
          %390 = vst.msk [vmem:[%s389] ss:$8 sm:$0x3] %vm382, 0.0
          %391 = vst.msk [vmem:[%s389] ss:$8 sm:$0x0] %vm382, 0.0
          %s392 = scalar_lea.vmem %s179, 55 [#allocation5]
          %393 = vst.msk [vmem:[%s392] ss:$8 sm:$0x3] %vm382, 0.0
          %394 = vst.msk [vmem:[%s392] ss:$8 sm:$0x0] %vm382, 0.0
          %s395 = scalar_lea.vmem %s179, 71 [#allocation5]
          %396 = vst.msk [vmem:[%s395] ss:$8 sm:$0x3] %vm382, 0.0
          %397 = vst.msk [vmem:[%s395] ss:$8 sm:$0x0] %vm382, 0.0
          %s398 = scalar_lea.vmem %s179, 87 [#allocation5]
          %399 = vst.msk [vmem:[%s398] ss:$8 sm:$0x3] %vm382, 0.0
          %400 = vst.msk [vmem:[%s398] ss:$8 sm:$0x0] %vm382, 0.0
          %s401 = scalar_lea.vmem %s179, 103 [#allocation5]
          %402 = vst.msk [vmem:[%s401] ss:$8 sm:$0x3] %vm382, 0.0
          %403 = vst.msk [vmem:[%s401] ss:$8 sm:$0x0] %vm382, 0.0
          %s404 = scalar_lea.vmem %s179, 119 [#allocation5]
          %405 = vst.msk [vmem:[%s404] ss:$8 sm:$0x3] %vm382, 0.0
          %406 = vst.msk [vmem:[%s404] ss:$8 sm:$0x0] %vm382, 0.0
        $region36: #{tpu_custom_call.1} parent=23 // pred_fallthru
          _
        %p407 = scmp.ge.s32.totalorder %s23, 1
        %p408 = scmp.lt.s32.totalorder %s23, 3
        %p409 = pnand %p407, %p408
        %p410 = pneg %p409
        // Predicated region
        $region37: #{tpu_custom_call.1} parent=23 // pred_check
          _
        $region38: #{tpu_custom_call.1} parent=23 // pred_check_branch
          %412 = sbr.rel (%p409) target = $region40
        $region39: #{tpu_custom_call.1} parent=23 // pred_region
          %v413 = vld [vmem:[%s161] sm:$0xff]
          %v414 = vld [vmem:[%s161 + $0x8] sm:$0xff]
          %v415 = vld [vmem:[%s161 + $0x10] sm:$0xff]
          %v416 = vld [vmem:[%s161 + $0x18] sm:$0xff]
          %v417 = vld [vmem:[%s161 + $0x20] sm:$0xff]
          %v418 = vld [vmem:[%s161 + $0x28] sm:$0xff]
          %v419 = vld [vmem:[%s161 + $0x30] sm:$0xff]
          %v420 = vld [vmem:[%s161 + $0x38] sm:$0xff]
          %v421 = vld [vmem:[%s161 + $0x40] sm:$0xff]
          %v422 = vld [vmem:[%s161 + $0x48] sm:$0xff]
          %v423 = vld [vmem:[%s161 + $0x50] sm:$0xff]
          %v424 = vld [vmem:[%s161 + $0x58] sm:$0xff]
          %v425 = vld [vmem:[%s161 + $0x60] sm:$0xff]
          %v426 = vld [vmem:[%s161 + $0x68] sm:$0xff]
          %v427 = vld [vmem:[%s161 + $0x70] sm:$0xff]
          %v428 = vld [vmem:[%s161 + $0x78] sm:$0xff]
          %429 = vst [vmem:[%s179] sm:$0xff] %v413
          %430 = vst [vmem:[%s179 + $0x8] sm:$0xff] %v414
          %431 = vst [vmem:[%s179 + $0x10] sm:$0xff] %v415
          %432 = vst [vmem:[%s179 + $0x18] sm:$0xff] %v416
          %433 = vst [vmem:[%s179 + $0x20] sm:$0xff] %v417
          %434 = vst [vmem:[%s179 + $0x28] sm:$0xff] %v418
          %435 = vst [vmem:[%s179 + $0x30] sm:$0xff] %v419
          %436 = vst [vmem:[%s179 + $0x38] sm:$0xff] %v420
          %437 = vst [vmem:[%s179 + $0x40] sm:$0xff] %v421
          %438 = vst [vmem:[%s179 + $0x48] sm:$0xff] %v422
          %439 = vst [vmem:[%s179 + $0x50] sm:$0xff] %v423
          %440 = vst [vmem:[%s179 + $0x58] sm:$0xff] %v424
          %441 = vst [vmem:[%s179 + $0x60] sm:$0xff] %v425
          %442 = vst [vmem:[%s179 + $0x68] sm:$0xff] %v426
          %443 = vst [vmem:[%s179 + $0x70] sm:$0xff] %v427
          %444 = vst [vmem:[%s179 + $0x78] sm:$0xff] %v428
        $region40: #{tpu_custom_call.1} parent=23 // pred_fallthru
          _
        %s445 = sand.u32 %s68, 1
        %s446 = scalar_lea.sflag [#allocation4], %s445
        %s447 = sand.u32 %s68, 1
        %s448 = smul.addr %s447, 128
        %s449 = scalar_lea.vmem [#allocation5], %s448
        // Predicated region
        $region41: #{tpu_custom_call.1} parent=23 // pred_check
          %p450 = pneg %p78
        $region42: #{tpu_custom_call.1} parent=23 // pred_check_branch
          %452 = sbr.rel (%p450) target = $region44
        $region43: #{tpu_custom_call.1} parent=23 // pred_region
          #allocation9 [shape = 'u32[6]{0}', space=smem, size = 0x18, scoped, tag = 'DMA stride descriptor']
          %s453 = smul.u32 2, %s22
          %s454 = smul.u32 4, %s23
          %s456 = ssub.s32 2048, 2048
          %457 = vsyncadd %s446, %s456
          %s458 = smul.addr %s454, 2
          %s459 = smul.addr %s453, 32
          %s460 = sadd.s32 %s458, %s459
          %s461 = smul.addr %s460, 128
          %s462 = scalar_lea.hbm %s1, %s461
          %s464 = sshll.u32 1, 14
          %s465 = sxor.u32 4294967295, %s464
          %s468 = sshll.u32 7, 18
          %s469 = sxor.u32 4294967295, %s468
          %s470 = sand.u32 0, %s469
          %s472 = sor.u32 %s470, 0
          %s473 = sshll.u32 %s449, 4
          %s474 = int_to_ptr.vmem [resolvable:$true] %s473
          %480 = sst [smem:[#allocation9]] 1024
          %s481 = scalar_lea.smem [#allocation9], 1
          %482 = sst [smem:[%s481]] 4096
          %s483 = scalar_lea.smem [#allocation9], 2
          %484 = sst [smem:[%s483]] 4
          %s485 = scalar_lea.smem [#allocation9], 3
          %486 = sst [smem:[%s485]] 256
          %s487 = scalar_lea.smem [#allocation9], 4
          %488 = sst [smem:[%s487]] 256
          %s489 = scalar_lea.smem [#allocation9], 5
          %490 = sst [smem:[%s489]] 16
          %492 = dma.general %s474, 2048, %s462, %s446, 131072, [#allocation9], %s472, 0
        $region44: #{tpu_custom_call.1} parent=23 // pred_fallthru
          _
      $region24: #{tpu_custom_call.1} parent=5 // pred_fallthru
        _
      %p493 = scmp.le.s32.totalorder 2, %s13
      // Predicated region
      $region45: #{tpu_custom_call.1} parent=5 // pred_check
        %p494 = pneg %p493
      $region46: #{tpu_custom_call.1} parent=5 // pred_check_branch
        %496 = sbr.rel (%p494) target = $region48
      $region47: #{tpu_custom_call.1} parent=5 // pred_region
        %s497 = ssub.s32 %s13, 2
        // Predicated region
        $region49: #{tpu_custom_call.1} parent=47 // pred_check
          %p498 = pneg %p84
        $region50: #{tpu_custom_call.1} parent=47 // pred_check_branch
          %500 = sbr.rel (%p498) target = $region52
        $region51: #{tpu_custom_call.1} parent=47 // pred_region
          %s501 = sand.u32 %s69, 1
          %s502 = scalar_lea.sflag [#allocation4], %s501
          %s503 = sand.u32 %s69, 1
          %s504 = smul.addr %s503, 128
          %s505 = scalar_lea.vmem [#allocation5], %s504
          %506 = dma.done %s502, 2048
        $region52: #{tpu_custom_call.1} parent=47 // pred_fallthru
          _
      $region48: #{tpu_custom_call.1} parent=5 // pred_fallthru
        _
    $region6: #{tpu_custom_call.1} parent=1 // loop_footer
      %s17 = sadd.s32 1, %s13
    $region7: #{tpu_custom_call.1} parent=1 // loop_footer_branch
      %12 = sbr.rel target = $region3
    $region8: #{tpu_custom_call.1} parent=1 // loop_exit
      _
    %507 = vsyncpa [#allocation3], 1
    %s508 = scalar_lea.sflag [#allocation3], 1
    %509 = vsyncpa %s508, 1
    %510 = vsyncpa [#allocation4], 1
    %s511 = scalar_lea.sflag [#allocation4], 1
    %512 = vsyncpa %s511, 1

</llo_original>
